<compile_context>
chip_gen: v7x
topology: tpu7x:2x2x1
jax: 0.10.0
libtpu: 0.0.40
codegen_flags: <defaults>
</compile_context>

<pallas_src>
import jax
import jax.numpy as jnp
from jax.experimental import pallas as pl
from jax.experimental.pallas import tpu as pltpu


def _transformer_loss_kernel(len_ref,        # scalar-prefetch SMEM (1,) int32: effective valid length
                             mel_out_ref,    # VMEM [B, C, T_TILE]
                             mel_ref,        # VMEM [B, C, T_TILE]
                             pe_ref,         # VMEM [4B, T_TILE]: pitch_pred, energy_pred, pitch_tgt, energy_tgt
                             out_ref,        # VMEM [1, 3, 8, 128] per-split partial sums
                             acc_mel_ref,    # VMEM [B, C, T_TILE] scratch accumulator
                             acc_pe_ref):    # VMEM [2B, T_TILE]  scratch accumulator
    s = pl.program_id(0)          # parallel split (TensorCore shard)
    t = pl.program_id(1)          # time-tile step within the split
    n_inner = pl.num_programs(1)
    b = mel_ref.shape[0]
    t_tile = mel_ref.shape[-1]

    @pl.when(t == 0)
    def _init():
        acc_mel_ref[...] = jnp.zeros_like(acc_mel_ref)
        acc_pe_ref[...] = jnp.zeros_like(acc_pe_ref)

    eff_len = len_ref[0]

    # Global time-block index (UNclamped).  The DMA index_map clamps out-of-range
    # block indices to the last valid block, but these t_ids then land at or past
    # T >= eff_len, so the duplicated / out-of-bounds data is masked to zero.
    global_blk = s * n_inner + t
    t_ids = jax.lax.broadcasted_iota(jnp.int32, (1, t_tile), 1) + global_blk * t_tile
    mask = t_ids < eff_len                                     # [1, T_TILE] bool

    # mel L1 partials: pure VPU adds into the VMEM accumulator (no per-step reduce).
    d_mel = mel_out_ref[...].astype(jnp.float32) - mel_ref[...].astype(jnp.float32)
    acc_mel_ref[...] += jnp.where(mask[None], jnp.abs(d_mel), 0.0)

    # pitch / energy MSE partials (rows [0:B]=pitch diff, [B:2B]=energy diff).
    pe = pe_ref[...].astype(jnp.float32)
    d_pe = pe[:2 * b] - pe[2 * b:]
    acc_pe_ref[...] += jnp.where(mask, d_pe * d_pe, 0.0)

    @pl.when(t == n_inner - 1)
    def _finalize():
        pe_acc = acc_pe_ref[...]
        mel_sum = jnp.sum(acc_mel_ref[...])
        pitch_sum = jnp.sum(pe_acc[:b])
        energy_sum = jnp.sum(pe_acc[b:])
        out_ref[0, 0] = jnp.full((8, 128), mel_sum, jnp.float32)
        out_ref[0, 1] = jnp.full((8, 128), pitch_sum, jnp.float32)
        out_ref[0, 2] = jnp.full((8, 128), energy_sum, jnp.float32)


def _as_bt(x):
    """[B, 1, T] or [B, T] -> [B, T]."""
    if x.ndim == 3:
        assert x.shape[1] == 1, "pitch/energy expected with a single channel"
        return x[:, 0, :]
    assert x.ndim == 2
    return x


def transformer_loss(pred, target, lengths, *, t_tile=1024, n_splits=None):
    """Pallas implementation of TransformerLoss.forward.

    pred   = (mel_output, pitch_out, energy_out)   mel: [B, C, T], pitch/energy: [B, 1, T]
    target = (mel, pitch, energy)                  same shapes as pred
    lengths = (text_lengths, mel_lengths)          mel_lengths is a scalar int
    returns (mel_loss, pitch_loss, energy_loss) scalars
    """
    mel_output, pitch_out, energy_out = pred
    mel, pitch, energy = target
    _text_lengths, mel_lengths = lengths

    assert mel_output.shape == mel.shape
    assert pitch_out.shape == pitch.shape
    assert energy_out.shape == energy.shape

    B, C, T = mel.shape

    # Merge the four small pitch/energy streams into one sublane-dense [4B, T] array.
    pe = jnp.concatenate(
        [_as_bt(pitch_out), _as_bt(energy_out), _as_bt(pitch), _as_bt(energy)], axis=0)

    # --- generation-aware VMEM budgeting --------------------------------------
    try:
        vmem_cap = int(pltpu.get_tpu_info().vmem_capacity_bytes)
    except Exception:
        vmem_cap = 64 << 20                 # v7x per-core size: safe lower bound
    ws_cap = int(vmem_cap * 0.375)          # ~37.5% of physical VMEM for the working set

    # --- time-tile selection (multiple of 128, no padding of the inputs) ------
    t_cap = max(128, ((T + 127) // 128) * 128)
    t_tile = max(128, (int(t_tile) // 128) * 128)
    t_tile = min(t_tile, t_cap)

    def _working_set(tt):
        mel_tile = B * C * tt * 4
        pe_tile = 4 * B * tt * 4
        dbuf = 2 * (2 * mel_tile + pe_tile)          # double-buffered pipelined inputs
        scratch = mel_tile + pe_tile // 2            # VMEM vector accumulators
        return dbuf + scratch

    while t_tile > 128 and _working_set(t_tile) > ws_cap:
        t_tile = max(128, ((t_tile // 2) // 128) * 128)

    n_t = pl.cdiv(T, t_tile)                         # total time blocks (ragged last block OK)
    if n_splits is None:
        n_splits = 2 if n_t >= 2 else 1              # shard time across TensorCores (v7x); harmless on 1-core chips
    n_splits = max(1, min(int(n_splits), n_t))
    n_inner = pl.cdiv(n_t, n_splits)

    # Effective valid length (matches masked_select count; also keeps OOB tail masked).
    eff_len = jnp.minimum(jnp.asarray(mel_lengths, dtype=jnp.int32), jnp.int32(T)).reshape((1,))

    def _time_blk(s, t):
        # Clamp so the DMA always targets a valid block; the kernel masks duplicates.
        return jnp.minimum(s * n_inner + t, n_t - 1)

    mel_spec = pl.BlockSpec((B, C, t_tile), lambda s, t, _len: (0, 0, _time_blk(s, t)))
    pe_spec = pl.BlockSpec((4 * B, t_tile), lambda s, t, _len: (0, _time_blk(s, t)))
    out_spec = pl.BlockSpec((1, 3, 8, 128), lambda s, t, _len: (s, 0, 0, 0))

    grid_spec = pltpu.PrefetchScalarGridSpec(
        num_scalar_prefetch=1,
        grid=(n_splits, n_inner),
        in_specs=[mel_spec, mel_spec, pe_spec],
        out_specs=out_spec,
        scratch_shapes=[
            pltpu.VMEM((B, C, t_tile), jnp.float32),
            pltpu.VMEM((2 * B, t_tile), jnp.float32),
        ],
    )

    ws = _working_set(t_tile)
    vmem_limit = int(min(max(2 * ws + (4 << 20), 16 << 20), int(vmem_cap * 0.6)))

    n_mel = B * C * T
    n_pe = 4 * B * T
    cost = pl.CostEstimate(
        flops=int(6 * n_mel + 3 * n_pe),
        transcendentals=0,
        bytes_accessed=int(4 * (2 * n_mel + n_pe) + n_splits * 3 * 8 * 128 * 4 + 4),
    )

    # NOTE: pl.Buffered(3) on the mel streams was considered (review item 7) but
    # kept at the default double-buffering for portability; the streams already
    # overlap DMA and compute fully in this configuration.
    out = pl.pallas_call(
        _transformer_loss_kernel,
        out_shape=jax.ShapeDtypeStruct((n_splits, 3, 8, 128), jnp.float32),
        grid_spec=grid_spec,
        compiler_params=pltpu.CompilerParams(
            dimension_semantics=("parallel", "arbitrary"),
            vmem_limit_bytes=vmem_limit,
        ),
        cost_estimate=cost,
    )(eff_len, mel_output, mel, pe)

    # Combine per-split partial sums and apply the masked-mean divisors in XLA.
    sums = out[:, :, 0, 0].sum(axis=0)               # (3,)
    eff_i = eff_len[0]
    eff_f = eff_i.astype(jnp.float32)
    nan = jnp.float32(jnp.nan)                       # PyTorch mean over empty selection -> NaN
    mel_loss = jnp.where(eff_i > 0, sums[0] / (eff_f * float(B * C)), nan)
    pitch_loss = jnp.where(eff_i > 0, sums[1] / (eff_f * float(B)), nan)
    energy_loss = jnp.where(eff_i > 0, sums[2] / (eff_f * float(B)), nan)
    return mel_loss, pitch_loss, energy_loss

    # TODO(synk): optionally pick n_splits from the actual per-chip TensorCore
    # count once a stable public query exists; 2 is correct everywhere and only
    # adds one masked duplicate tile on single-core chips.


def _reference(pred, target, mel_lengths):
    """Pure-JAX reference for a correctness check."""
    mel_output, pitch_out, energy_out = pred
    mel, pitch, energy = target
    T = mel.shape[2]
    mask = (jnp.arange(T) < mel_lengths)[None, None, :]

    def mean_sel(a, b, absolute, cshape):
        d = a - b
        v = jnp.abs(d) if absolute else d * d
        cnt = cshape[0] * cshape[1] * mel_lengths
        return jnp.sum(jnp.where(mask, v, 0.0)) / cnt

    return (mean_sel(mel_output, mel, True, mel.shape),
            mean_sel(pitch_out, pitch, False, pitch.shape),
            mean_sel(energy_out, energy, False, energy.shape))


if __name__ == "__main__":
    B, C_MEL, T = 2, 8, 300
    mel_lengths = 280  # valid frames; t in [0, 280) kept by the mask (T=300 is ragged vs 128)

    key = jax.random.PRNGKey(0)
    ks = jax.random.split(key, 6)
    mel_output = jax.random.normal(ks[0], (B, C_MEL, T), dtype=jnp.float32)
    mel        = jax.random.normal(ks[1], (B, C_MEL, T), dtype=jnp.float32)
    pitch_out  = jax.random.normal(ks[2], (B, 1, T), dtype=jnp.float32)
    pitch      = jax.random.normal(ks[3], (B, 1, T), dtype=jnp.float32)
    energy_out = jax.random.normal(ks[4], (B, 1, T), dtype=jnp.float32)
    energy     = jax.random.normal(ks[5], (B, 1, T), dtype=jnp.float32)

    text_lengths = jnp.array([T], dtype=jnp.int32)  # unused by forward (signature parity)

    pred = (mel_output, pitch_out, energy_out)
    target = (mel, pitch, energy)
    lengths = (text_lengths, jnp.int32(mel_lengths))

    ref = _reference(pred, target, mel_lengths)

    # Multi-tile, 2-way-split grid path: n_t=3 time tiles of 128 (last one ragged
    # past T=300), split across two "cores" -> exercises clamp + mask + accumulate.
    mel_loss, pitch_loss, energy_loss = transformer_loss(pred, target, lengths, t_tile=128)
    jax.block_until_ready((mel_loss, pitch_loss, energy_loss))
    assert jnp.allclose(mel_loss, ref[0], rtol=1e-5, atol=1e-5)
    assert jnp.allclose(pitch_loss, ref[1], rtol=1e-5, atol=1e-5)
    assert jnp.allclose(energy_loss, ref[2], rtol=1e-5, atol=1e-5)

    # Default tile path: single ragged tile (384 block over 300 frames), single split.
    mel_loss2, pitch_loss2, energy_loss2 = transformer_loss(pred, target, lengths)
    jax.block_until_ready((mel_loss2, pitch_loss2, energy_loss2))
    assert jnp.allclose(mel_loss2, ref[0], rtol=1e-5, atol=1e-5)
    assert jnp.allclose(pitch_loss2, ref[1], rtol=1e-5, atol=1e-5)
    assert jnp.allclose(energy_loss2, ref[2], rtol=1e-5, atol=1e-5)

    print("KERNEL_OK")
</pallas_src>

<mosaic_0001>
module attributes {stable_mosaic.version = 11 : i64} {
  func.func @_transformer_loss_kernel(%arg0: i32, %arg1: i32, %arg2: memref<1xi32, #tpu.memory_space<smem>>, %arg3: memref<2x8x128xf32, #tpu.memory_space<vmem>>, %arg4: memref<2x8x128xf32, #tpu.memory_space<vmem>>, %arg5: memref<8x128xf32, #tpu.memory_space<vmem>>, %arg6: memref<1x3x8x128xf32, #tpu.memory_space<vmem>>, %arg7: memref<2x8x128xf32, #tpu.memory_space<vmem>>, %arg8: memref<4x128xf32, #tpu.memory_space<vmem>>) attributes {dimension_semantics = [#tpu.dimension_semantics<parallel>, #tpu.dimension_semantics<arbitrary>], iteration_bounds = array<i64: 2, 2>, scalar_prefetch = 1 : i64, scratch_operands = 2 : i64, tpu.core_type = #tpu.core_type<tc>, window_params = [{transform_indices = @transform_0, window_bounds = array<i64: 2, 8, 128>}, {transform_indices = @transform_1, window_bounds = array<i64: 2, 8, 128>}, {transform_indices = @transform_2, window_bounds = array<i64: 8, 128>}, {transform_indices = @transform_3, window_bounds = array<i64: 1, 3, 8, 128>}]} {
    %c0_i32 = arith.constant 0 : i32
    %0 = arith.cmpi eq, %arg1, %c0_i32 : i32
    %1 = arith.extui %0 : i1 to i32
    %c0_i32_0 = arith.constant 0 : i32
    %2 = arith.cmpi ne, %1, %c0_i32_0 : i32
    scf.if %2 {
      %cst_21 = arith.constant 0.000000e+00 : f32
      %39 = vector.broadcast %cst_21 : f32 to vector<2x8x128xf32>
      %c0_22 = arith.constant 0 : index
      %c0_23 = arith.constant 0 : index
      %c0_24 = arith.constant 0 : index
      %40 = vector.load %arg7[%c0_22, %c0_23, %c0_24] : memref<2x8x128xf32, #tpu.memory_space<vmem>>, vector<2x8x128xf32>
      tpu.vector_store %arg7[%c0_22, %c0_23, %c0_24], %39 {strides = array<i32>} : memref<2x8x128xf32, #tpu.memory_space<vmem>>, vector<2x8x128xf32>,
      %cst_25 = arith.constant 0.000000e+00 : f32
      %41 = vector.broadcast %cst_25 : f32 to vector<4x128xf32>
      %c0_26 = arith.constant 0 : index
      %c0_27 = arith.constant 0 : index
      %42 = vector.load %arg8[%c0_26, %c0_27] : memref<4x128xf32, #tpu.memory_space<vmem>>, vector<4x128xf32>
      tpu.vector_store %arg8[%c0_26, %c0_27], %41 {strides = array<i32>} : memref<4x128xf32, #tpu.memory_space<vmem>>, vector<4x128xf32>,
    } else {
    }
    %c0 = arith.constant 0 : index
    %3 = memref.load %arg2[%c0] : memref<1xi32, #tpu.memory_space<smem>>
    %c2_i32 = arith.constant 2 : i32
    %4 = arith.muli %arg0, %c2_i32 : i32
    %5 = arith.addi %4, %arg1 : i32
    %6 = tpu.iota {dimensions = array<i32: 1>} : vector<1x128xi32>
    %c128_i32 = arith.constant 128 : i32
    %7 = arith.muli %5, %c128_i32 : i32
    %8 = vector.broadcast %7 : i32 to vector<1x128xi32>
    %9 = arith.addi %6, %8 : vector<1x128xi32>
    %10 = vector.broadcast %3 : i32 to vector<1x128xi32>
    %11 = arith.cmpi slt, %9, %10 : vector<1x128xi32>
    %c0_1 = arith.constant 0 : index
    %c0_2 = arith.constant 0 : index
    %c0_3 = arith.constant 0 : index
    %12 = vector.load %arg3[%c0_1, %c0_2, %c0_3] : memref<2x8x128xf32, #tpu.memory_space<vmem>>, vector<2x8x128xf32>
    %c0_4 = arith.constant 0 : index
    %c0_5 = arith.constant 0 : index
    %c0_6 = arith.constant 0 : index
    %13 = vector.load %arg4[%c0_4, %c0_5, %c0_6] : memref<2x8x128xf32, #tpu.memory_space<vmem>>, vector<2x8x128xf32>
    %14 = arith.subf %12, %13 : vector<2x8x128xf32>
    %c0_7 = arith.constant 0 : index
    %c0_8 = arith.constant 0 : index
    %c0_9 = arith.constant 0 : index
    %15 = vector.load %arg7[%c0_7, %c0_8, %c0_9] : memref<2x8x128xf32, #tpu.memory_space<vmem>>, vector<2x8x128xf32>
    %16 = vector.shape_cast %11 : vector<1x128xi1> to vector<1x1x128xi1>
    %17 = math.absf %14 : vector<2x8x128xf32>
    %cst = arith.constant 0.000000e+00 : f32
    %18 = vector.shape_cast %16 : vector<1x1x128xi1> to vector<1x1x128xi1>
    %19 = vector.broadcast %18 : vector<1x1x128xi1> to vector<2x8x128xi1>
    %20 = vector.broadcast %cst : f32 to vector<2x8x128xf32>
    %21 = arith.select %19, %17, %20 : vector<2x8x128xi1>, vector<2x8x128xf32>
    %22 = arith.addf %15, %21 : vector<2x8x128xf32>
    %c0_10 = arith.constant 0 : index
    %c0_11 = arith.constant 0 : index
    %c0_12 = arith.constant 0 : index
    %23 = vector.load %arg7[%c0_10, %c0_11, %c0_12] : memref<2x8x128xf32, #tpu.memory_space<vmem>>, vector<2x8x128xf32>
    tpu.vector_store %arg7[%c0_10, %c0_11, %c0_12], %22 {strides = array<i32>} : memref<2x8x128xf32, #tpu.memory_space<vmem>>, vector<2x8x128xf32>,
    %c0_13 = arith.constant 0 : index
    %c0_14 = arith.constant 0 : index
    %24 = vector.load %arg5[%c0_13, %c0_14] : memref<8x128xf32, #tpu.memory_space<vmem>>, vector<8x128xf32>
    %25 = vector.extract_strided_slice %24 {offsets = [0, 0], sizes = [4, 128], strides = [1, 1]} : vector<8x128xf32> to vector<4x128xf32>
    %26 = vector.extract_strided_slice %24 {offsets = [4, 0], sizes = [4, 128], strides = [1, 1]} : vector<8x128xf32> to vector<4x128xf32>
    %27 = arith.subf %25, %26 : vector<4x128xf32>
    %c0_15 = arith.constant 0 : index
    %c0_16 = arith.constant 0 : index
    %28 = vector.load %arg8[%c0_15, %c0_16] : memref<4x128xf32, #tpu.memory_space<vmem>>, vector<4x128xf32>
    %29 = arith.mulf %27, %27 : vector<4x128xf32>
    %cst_17 = arith.constant 0.000000e+00 : f32
    %30 = vector.shape_cast %11 : vector<1x128xi1> to vector<1x128xi1>
    %31 = vector.broadcast %30 : vector<1x128xi1> to vector<4x128xi1>
    %32 = vector.broadcast %cst_17 : f32 to vector<4x128xf32>
    %33 = arith.select %31, %29, %32 : vector<4x128xi1>, vector<4x128xf32>
    %34 = arith.addf %28, %33 : vector<4x128xf32>
    %c0_18 = arith.constant 0 : index
    %c0_19 = arith.constant 0 : index
    %35 = vector.load %arg8[%c0_18, %c0_19] : memref<4x128xf32, #tpu.memory_space<vmem>>, vector<4x128xf32>
    tpu.vector_store %arg8[%c0_18, %c0_19], %34 {strides = array<i32>} : memref<4x128xf32, #tpu.memory_space<vmem>>, vector<4x128xf32>,
    %c1_i32 = arith.constant 1 : i32
    %36 = arith.cmpi eq, %arg1, %c1_i32 : i32
    %37 = arith.extui %36 : i1 to i32
    %c0_i32_20 = arith.constant 0 : i32
    %38 = arith.cmpi ne, %37, %c0_i32_20 : i32
    scf.if %38 {
      %c0_21 = arith.constant 0 : index
      %c0_22 = arith.constant 0 : index
      %39 = vector.load %arg8[%c0_21, %c0_22] : memref<4x128xf32, #tpu.memory_space<vmem>>, vector<4x128xf32>
      %c0_23 = arith.constant 0 : index
      %c0_24 = arith.constant 0 : index
      %c0_25 = arith.constant 0 : index
      %40 = vector.load %arg7[%c0_23, %c0_24, %c0_25] : memref<2x8x128xf32, #tpu.memory_space<vmem>>, vector<2x8x128xf32>
      %41 = vector.shape_cast %40 : vector<2x8x128xf32> to vector<1x2x8x128xf32>
      %cst_26 = arith.constant dense<0.000000e+00> : vector<1xf32>
      %42 = vector.multi_reduction <add>, %41, %cst_26 [1, 2, 3] : vector<1x2x8x128xf32> to vector<1xf32>
      %43 = vector.shape_cast %42 : vector<1xf32> to vector<1x1x1x1xf32>
      %44 = vector.extract %43[0, 0, 0, 0] : f32 from vector<1x1x1x1xf32>
      %45 = vector.extract_strided_slice %39 {offsets = [0, 0], sizes = [2, 128], strides = [1, 1]} : vector<4x128xf32> to vector<2x128xf32>
      %46 = vector.shape_cast %45 : vector<2x128xf32> to vector<1x2x128xf32>
      %cst_27 = arith.constant dense<0.000000e+00> : vector<1xf32>
      %47 = vector.multi_reduction <add>, %46, %cst_27 [1, 2] : vector<1x2x128xf32> to vector<1xf32>
      %48 = vector.shape_cast %47 : vector<1xf32> to vector<1x1x1xf32>
      %49 = vector.extract %48[0, 0, 0] : f32 from vector<1x1x1xf32>
      %50 = vector.extract_strided_slice %39 {offsets = [2, 0], sizes = [2, 128], strides = [1, 1]} : vector<4x128xf32> to vector<2x128xf32>
      %51 = vector.shape_cast %50 : vector<2x128xf32> to vector<1x2x128xf32>
      %cst_28 = arith.constant dense<0.000000e+00> : vector<1xf32>
      %52 = vector.multi_reduction <add>, %51, %cst_28 [1, 2] : vector<1x2x128xf32> to vector<1xf32>
      %53 = vector.shape_cast %52 : vector<1xf32> to vector<1x1x1xf32>
      %54 = vector.extract %53[0, 0, 0] : f32 from vector<1x1x1xf32>
      %55 = vector.broadcast %44 : f32 to vector<8x128xf32>
      %c0_29 = arith.constant 0 : index
      %c0_30 = arith.constant 0 : index
      %c0_31 = arith.constant 0 : index
      %c0_32 = arith.constant 0 : index
      %56 = vector.load %arg6[%c0_29, %c0_30, %c0_31, %c0_32] : memref<1x3x8x128xf32, #tpu.memory_space<vmem>>, vector<1x1x8x128xf32>
      %57 = vector.shape_cast %56 : vector<1x1x8x128xf32> to vector<8x128xf32>
      %58 = vector.shape_cast %55 : vector<8x128xf32> to vector<1x1x8x128xf32>
      tpu.vector_store %arg6[%c0_29, %c0_30, %c0_31, %c0_32], %58 {strides = array<i32>} : memref<1x3x8x128xf32, #tpu.memory_space<vmem>>, vector<1x1x8x128xf32>,
      %59 = vector.broadcast %49 : f32 to vector<8x128xf32>
      %c0_33 = arith.constant 0 : index
      %c1 = arith.constant 1 : index
      %c0_34 = arith.constant 0 : index
      %c0_35 = arith.constant 0 : index
      %60 = vector.load %arg6[%c0_33, %c1, %c0_34, %c0_35] : memref<1x3x8x128xf32, #tpu.memory_space<vmem>>, vector<1x1x8x128xf32>
      %61 = vector.shape_cast %60 : vector<1x1x8x128xf32> to vector<8x128xf32>
      %62 = vector.shape_cast %59 : vector<8x128xf32> to vector<1x1x8x128xf32>
      tpu.vector_store %arg6[%c0_33, %c1, %c0_34, %c0_35], %62 {strides = array<i32>} : memref<1x3x8x128xf32, #tpu.memory_space<vmem>>, vector<1x1x8x128xf32>,
      %63 = vector.broadcast %54 : f32 to vector<8x128xf32>
      %c0_36 = arith.constant 0 : index
      %c2 = arith.constant 2 : index
      %c0_37 = arith.constant 0 : index
      %c0_38 = arith.constant 0 : index
      %64 = vector.load %arg6[%c0_36, %c2, %c0_37, %c0_38] : memref<1x3x8x128xf32, #tpu.memory_space<vmem>>, vector<1x1x8x128xf32>
      %65 = vector.shape_cast %64 : vector<1x1x8x128xf32> to vector<8x128xf32>
      %66 = vector.shape_cast %63 : vector<8x128xf32> to vector<1x1x8x128xf32>
      tpu.vector_store %arg6[%c0_36, %c2, %c0_37, %c0_38], %66 {strides = array<i32>} : memref<1x3x8x128xf32, #tpu.memory_space<vmem>>, vector<1x1x8x128xf32>,
    } else {
    }
    return
  }
  func.func @transform_0(%arg0: i32, %arg1: i32, %arg2: memref<1xi32, #tpu.memory_space<smem>>) -> (i32, i32, i32) {
    %c2_i32 = arith.constant 2 : i32
    %0 = arith.muli %arg0, %c2_i32 : i32
    %1 = arith.addi %0, %arg1 : i32
    %c2_i32_0 = arith.constant 2 : i32
    %2 = arith.minsi %1, %c2_i32_0 : i32
    %c0_i32 = arith.constant 0 : i32
    %c0_i32_1 = arith.constant 0 : i32
    %c0_i32_2 = arith.constant 0 : i32
    return %c0_i32, %c0_i32_1, %2 : i32, i32, i32
  }
  func.func @transform_1(%arg0: i32, %arg1: i32, %arg2: memref<1xi32, #tpu.memory_space<smem>>) -> (i32, i32, i32) {
    %c2_i32 = arith.constant 2 : i32
    %0 = arith.muli %arg0, %c2_i32 : i32
    %1 = arith.addi %0, %arg1 : i32
    %c2_i32_0 = arith.constant 2 : i32
    %2 = arith.minsi %1, %c2_i32_0 : i32
    %c0_i32 = arith.constant 0 : i32
    %c0_i32_1 = arith.constant 0 : i32
    %c0_i32_2 = arith.constant 0 : i32
    return %c0_i32, %c0_i32_1, %2 : i32, i32, i32
  }
  func.func @transform_2(%arg0: i32, %arg1: i32, %arg2: memref<1xi32, #tpu.memory_space<smem>>) -> (i32, i32) {
    %c2_i32 = arith.constant 2 : i32
    %0 = arith.muli %arg0, %c2_i32 : i32
    %1 = arith.addi %0, %arg1 : i32
    %c2_i32_0 = arith.constant 2 : i32
    %2 = arith.minsi %1, %c2_i32_0 : i32
    %c0_i32 = arith.constant 0 : i32
    %c0_i32_1 = arith.constant 0 : i32
    return %c0_i32, %2 : i32, i32
  }
  func.func @transform_3(%arg0: i32, %arg1: i32, %arg2: memref<1xi32, #tpu.memory_space<smem>>) -> (i32, i32, i32, i32) {
    %c0_i32 = arith.constant 0 : i32
    %c0_i32_0 = arith.constant 0 : i32
    %c0_i32_1 = arith.constant 0 : i32
    %c0_i32_2 = arith.constant 0 : i32
    return %arg0, %c0_i32, %c0_i32_0, %c0_i32_1 : i32, i32, i32, i32
  }
}

</mosaic_0001>

<llo_original>
// kernel: tpu_custom_call.1
$region0: #{tpu_custom_call.1}
  #allocation0 [shape = 'u32[]', space=smem, size = 0x4, offset = 0x4, fixed_abs, tag = 'smem constant byte address 0x4 - core index']
  #allocation1 [shape = 'u32[144,128]{1,0:T(1,128)}', space=vmem, size = 0x12000, scoped, tag = 'internal scratch']
  #allocation2 [shape = 'f32[2,8,128]{2,1,0:T(8,128)}', space=vmem, size = 0x2000, scoped, tag = 'scratch operand']
  #allocation3 [shape = 'f32[4,128]{1,0:T(4,128)}', space=vmem, size = 0x800, scoped, tag = 'scratch operand']
  #allocation4 [shape = 's32[1]{0}', space=sflag, size = 0x4, scoped, tag = 'scoped memory for tpu_custom_call.1']
  #allocation5 [shape = 's32[1]{0:T(128)S(6)}', space=smem, size = 0x200, scoped, tag = 'prefetched SMEM operand 0']
  %s0 = inlined_call_operand.<no memory space> [shape: s32[1], index: 0, kind: input, shape index: {}]
  %s1 = inlined_call_operand.hbm [shape: f32[2,8,300], index: 1, kind: input, shape index: {}]
  %s2 = inlined_call_operand.hbm [shape: f32[2,8,300], index: 2, kind: input, shape index: {}]
  %s3 = inlined_call_operand.hbm [shape: f32[8,300], index: 3, kind: input, shape index: {}]
  %s4 = inlined_call_operand.hbm [shape: f32[2,3,8,128], index: 4, kind: output, shape index: {}]
  %s5 = sld [smem:[#allocation0]]
  $region65: #{tpu_custom_call.1} parent=0
    _
  %s7 = ssub.s32 1, %s5
  %s8 = scalar_select 0, %s7, %s5
  %9 = sst [smem:[#allocation5]] %s0
  $region1: #{tpu_custom_call.1} parent=0
    #allocation6 [shape = 'u8[16384]{0}', space=vmem, size = 0x4000, scoped, tag = 'input window, operand 1']
    #allocation7 [shape = 's32[2]{0}', space=sflag, size = 0x8, scoped, tag = 'scoped memory for tpu_custom_call.1']
    #allocation8 [shape = 's32[2]{0}', space=sflag, size = 0x8, scoped, tag = 'scoped memory for tpu_custom_call.1']
    #allocation9 [shape = 'u8[16384]{0}', space=vmem, size = 0x4000, scoped, tag = 'input window, operand 2']
    #allocation10 [shape = 's32[2]{0}', space=sflag, size = 0x8, scoped, tag = 'scoped memory for tpu_custom_call.1']
    #allocation11 [shape = 'u8[8192]{0}', space=vmem, size = 0x2000, scoped, tag = 'input window, operand 3']
    #allocation12 [shape = 'u8[24576]{0}', space=vmem, size = 0x6000, scoped, tag = 'output window, operand 0']
    %10 = vsyncpa [#allocation7], 0
    %s11 = scalar_lea.sflag [#allocation7], 1
    %12 = vsyncpa %s11, 0
    %13 = vsyncpa [#allocation10], 0
    %s14 = scalar_lea.sflag [#allocation10], 1
    %15 = vsyncpa %s14, 0
    %16 = vsyncpa [#allocation8], 0
    %s17 = scalar_lea.sflag [#allocation8], 1
    %18 = vsyncpa %s17, 0
    loop: start=0, step=1, limit=6
    $region2: #{tpu_custom_call.1} parent=1 // loop_pre_header
      _
    $region3: #{tpu_custom_call.1} parent=1 // loop_header
      %s20 = sphi 0, %s24
      %p21 = scmp.ge.s32.totalorder %s20, 6
      %s27 = sphi 0, %s39
      %s28 = sphi 0, %s35
      %s29 = sphi 0, %s27
      %s30 = sphi 0, %s28
      %s31 = sphi 0, %s29
      %s32 = sphi 0, %s30
      %s50 = sphi 0, %s52
      %s53 = sphi 0, %s50
      %s54 = sphi 0, %s53
      %s70 = sphi 0, %s54
      %s84 = sphi 0, %s86
      %s87 = sphi 0, %s84
      %s88 = sphi 0, %s87
      %s104 = sphi 0, %s88
      %s118 = sphi 0, %s120
      %s121 = sphi 0, %s118
      %s122 = sphi 0, %s121
      %s138 = sphi 0, %s122
      %s144 = sphi 0, %s146
      %s147 = sphi 0, %s144
      %s148 = sphi 0, %s147
      %s164 = sphi 0, %s148
    $region4: #{tpu_custom_call.1} parent=1 // loop_header_branch
      %23 = sbr.rel (%p21) target = $region8
    $region5: #{tpu_custom_call.1} parent=1 // loop_body
      %s25 = ssub.s32 %s20, 1
      %s26 = ssub.s32 %s20, 2
      %s33 = sadd.s32 1, %s28
      %p34 = scmp.ge.s32.totalorder %s33, 2
      %s35 = scalar_select %p34, 0, %s33
      %s36 = sadd.s32 1, %s27
      %s37 = scalar_select %p34, %s36, %s27
      %p38 = scmp.ge.s32.totalorder %s37, 2
      %s39 = scalar_select %p38, 0, %s37
      %s40 = smul.u32 %s27, 2
      %s41 = sadd.s32 %s40, %s28
      %p42 = scmp.lt.s32.totalorder %s41, 2
      %s43 = scalar_select %p42, %s41, 2
      %s44 = smul.u32 %s39, 2
      %s45 = sadd.s32 %s44, %s35
      %p46 = scmp.lt.s32.totalorder %s45, 2
      %s47 = scalar_select %p46, %s45, 2
      %s48 = ssub.s32 %s43, %s47
      %p49 = scmp.eq.s32.totalorder %s48, 0
      %s51 = sadd.s32 %s50, 1
      %s52 = scalar_select %p49, %s50, %s51
      %p55 = pneg %p49
      %p56 = scmp.eq.s32.totalorder %s20, 3
      %p57 = por %p55, %p56
      %p58 = scmp.ne.s32.totalorder %s50, %s53
      %p59 = scmp.eq.s32.totalorder %s20, 0
      %p60 = por %p58, %p59
      %p61 = scmp.ne.s32.totalorder %s50, %s53
      %p62 = scmp.eq.s32.totalorder %s25, 3
      %p63 = por %p61, %p62
      %p64 = scmp.ne.s32.totalorder %s53, %s54
      %p65 = scmp.eq.s32.totalorder %s25, 0
      %p66 = por %p64, %p65
      %p67 = scmp.ne.s32.totalorder %s53, %s54
      %p68 = scmp.eq.s32.totalorder %s26, 3
      %p69 = por %p67, %p68
      %p71 = scmp.ne.s32.totalorder %s54, %s70
      %p72 = scmp.eq.s32.totalorder %s26, 0
      %p73 = por %p71, %p72
      %s74 = smul.u32 %s27, 2
      %s75 = sadd.s32 %s74, %s28
      %p76 = scmp.lt.s32.totalorder %s75, 2
      %s77 = scalar_select %p76, %s75, 2
      %s78 = smul.u32 %s39, 2
      %s79 = sadd.s32 %s78, %s35
      %p80 = scmp.lt.s32.totalorder %s79, 2
      %s81 = scalar_select %p80, %s79, 2
      %s82 = ssub.s32 %s77, %s81
      %p83 = scmp.eq.s32.totalorder %s82, 0
      %s85 = sadd.s32 %s84, 1
      %s86 = scalar_select %p83, %s84, %s85
      %p89 = pneg %p83
      %p90 = scmp.eq.s32.totalorder %s20, 3
      %p91 = por %p89, %p90
      %p92 = scmp.ne.s32.totalorder %s84, %s87
      %p93 = scmp.eq.s32.totalorder %s20, 0
      %p94 = por %p92, %p93
      %p95 = scmp.ne.s32.totalorder %s84, %s87
      %p96 = scmp.eq.s32.totalorder %s25, 3
      %p97 = por %p95, %p96
      %p98 = scmp.ne.s32.totalorder %s87, %s88
      %p99 = scmp.eq.s32.totalorder %s25, 0
      %p100 = por %p98, %p99
      %p101 = scmp.ne.s32.totalorder %s87, %s88
      %p102 = scmp.eq.s32.totalorder %s26, 3
      %p103 = por %p101, %p102
      %p105 = scmp.ne.s32.totalorder %s88, %s104
      %p106 = scmp.eq.s32.totalorder %s26, 0
      %p107 = por %p105, %p106
      %s108 = smul.u32 %s27, 2
      %s109 = sadd.s32 %s108, %s28
      %p110 = scmp.lt.s32.totalorder %s109, 2
      %s111 = scalar_select %p110, %s109, 2
      %s112 = smul.u32 %s39, 2
      %s113 = sadd.s32 %s112, %s35
      %p114 = scmp.lt.s32.totalorder %s113, 2
      %s115 = scalar_select %p114, %s113, 2
      %s116 = ssub.s32 %s111, %s115
      %p117 = scmp.eq.s32.totalorder %s116, 0
      %s119 = sadd.s32 %s118, 1
      %s120 = scalar_select %p117, %s118, %s119
      %p123 = pneg %p117
      %p124 = scmp.eq.s32.totalorder %s20, 3
      %p125 = por %p123, %p124
      %p126 = scmp.ne.s32.totalorder %s118, %s121
      %p127 = scmp.eq.s32.totalorder %s20, 0
      %p128 = por %p126, %p127
      %p129 = scmp.ne.s32.totalorder %s118, %s121
      %p130 = scmp.eq.s32.totalorder %s25, 3
      %p131 = por %p129, %p130
      %p132 = scmp.ne.s32.totalorder %s121, %s122
      %p133 = scmp.eq.s32.totalorder %s25, 0
      %p134 = por %p132, %p133
      %p135 = scmp.ne.s32.totalorder %s121, %s122
      %p136 = scmp.eq.s32.totalorder %s26, 3
      %p137 = por %p135, %p136
      %p139 = scmp.ne.s32.totalorder %s122, %s138
      %p140 = scmp.eq.s32.totalorder %s26, 0
      %p141 = por %p139, %p140
      %s142 = ssub.s32 %s27, %s39
      %p143 = scmp.eq.s32.totalorder %s142, 0
      %s145 = sadd.s32 %s144, 1
      %s146 = scalar_select %p143, %s144, %s145
      %p149 = pneg %p143
      %p150 = scmp.eq.s32.totalorder %s20, 3
      %p151 = por %p149, %p150
      %p152 = scmp.ne.s32.totalorder %s144, %s147
      %p153 = scmp.eq.s32.totalorder %s20, 0
      %p154 = por %p152, %p153
      %p155 = scmp.ne.s32.totalorder %s144, %s147
      %p156 = scmp.eq.s32.totalorder %s25, 3
      %p157 = por %p155, %p156
      %p158 = scmp.ne.s32.totalorder %s147, %s148
      %p159 = scmp.eq.s32.totalorder %s25, 0
      %p160 = por %p158, %p159
      %p161 = scmp.ne.s32.totalorder %s147, %s148
      %p162 = scmp.eq.s32.totalorder %s26, 3
      %p163 = por %p161, %p162
      %p165 = scmp.ne.s32.totalorder %s148, %s164
      %p166 = scmp.eq.s32.totalorder %s26, 0
      %p167 = por %p165, %p166
      %p168 = scmp.le.s32.totalorder 1, %s20
      %p169 = scmp.lt.s32.totalorder %s20, 5
      %p170 = pnand %p168, %p169
      %p171 = pneg %p170
      // Predicated region
      $region9: #{tpu_custom_call.1} parent=5 // pred_check
        _
      $region10: #{tpu_custom_call.1} parent=5 // pred_check_branch
        %173 = sbr.rel (%p170) target = $region12
      $region11: #{tpu_custom_call.1} parent=5 // pred_region
        %s174 = ssub.s32 %s20, 1
      $region12: #{tpu_custom_call.1} parent=5 // pred_fallthru
        _
      %p175 = scmp.lt.s32.totalorder %s20, 4
      // Predicated region
      $region13: #{tpu_custom_call.1} parent=5 // pred_check
        %p176 = pneg %p175
      $region14: #{tpu_custom_call.1} parent=5 // pred_check_branch
        %178 = sbr.rel (%p176) target = $region16
      $region15: #{tpu_custom_call.1} parent=5 // pred_region
        // Predicated region
        $region17: #{tpu_custom_call.1} parent=15 // pred_check
          %p179 = pneg %p60
        $region18: #{tpu_custom_call.1} parent=15 // pred_check_branch
          %181 = sbr.rel (%p179) target = $region20
        $region19: #{tpu_custom_call.1} parent=15 // pred_region
          %s182 = sand.u32 %s50, 1
          %s183 = scalar_lea.sflag [#allocation7], %s182
          %s184 = sand.u32 %s50, 1
          %s185 = smul.addr %s184, 16
          %s186 = scalar_lea.vmem [#allocation6], %s185
          %s187 = smul.u32 %s27, 2
          %s188 = sadd.s32 %s187, %s28
          %p189 = scmp.lt.s32.totalorder %s188, 2
          %s190 = scalar_select %p189, %s188, 2
          %s192 = ssub.s32 256, 256
          %193 = vsyncadd %s183, %s192
          %s194 = smul.addr %s190, 128
          %s195 = scalar_lea.hbm %s1, %s194
          %s196 = sshll.u32 %s186, 4
          %s197 = int_to_ptr.vmem [resolvable:$true] %s196
          %202 = dma.hbm_to_vmem [thread:$0]  %s195, 256, %s197, %s183, 384, 128, 8
        $region20: #{tpu_custom_call.1} parent=15 // pred_fallthru
          _
        // Predicated region
        $region21: #{tpu_custom_call.1} parent=15 // pred_check
          %p203 = pneg %p94
        $region22: #{tpu_custom_call.1} parent=15 // pred_check_branch
          %205 = sbr.rel (%p203) target = $region24
        $region23: #{tpu_custom_call.1} parent=15 // pred_region
          %s206 = sand.u32 %s20, 1
          %s207 = scalar_lea.sflag [#allocation10], %s206
          %s208 = sand.u32 %s84, 1
          %s209 = smul.addr %s208, 16
          %s210 = scalar_lea.vmem [#allocation9], %s209
          %s211 = smul.u32 %s27, 2
          %s212 = sadd.s32 %s211, %s28
          %p213 = scmp.lt.s32.totalorder %s212, 2
          %s214 = scalar_select %p213, %s212, 2
          %s216 = ssub.s32 256, 256
          %217 = vsyncadd %s207, %s216
          %s218 = smul.addr %s214, 128
          %s219 = scalar_lea.hbm %s2, %s218
          %s220 = sshll.u32 %s210, 4
          %s221 = int_to_ptr.vmem [resolvable:$true] %s220
          %226 = dma.hbm_to_vmem [thread:$0]  %s219, 256, %s221, %s207, 384, 128, 8
        $region24: #{tpu_custom_call.1} parent=15 // pred_fallthru
          _
        // Predicated region
        $region25: #{tpu_custom_call.1} parent=15 // pred_check
          %p227 = pneg %p128
        $region26: #{tpu_custom_call.1} parent=15 // pred_check_branch
          %229 = sbr.rel (%p227) target = $region28
        $region27: #{tpu_custom_call.1} parent=15 // pred_region
          %s230 = sand.u32 %s20, 1
          %s231 = scalar_lea.sflag [#allocation10], %s230
          %s232 = sand.u32 %s118, 1
          %s233 = smul.addr %s232, 8
          %s234 = scalar_lea.vmem [#allocation11], %s233
          %s235 = smul.u32 %s27, 2
          %s236 = sadd.s32 %s235, %s28
          %p237 = scmp.lt.s32.totalorder %s236, 2
          %s238 = scalar_select %p237, %s236, 2
          %s240 = ssub.s32 128, 128
          %241 = vsyncadd %s231, %s240
          %s242 = smul.addr %s238, 128
          %s243 = scalar_lea.hbm %s3, %s242
          %s245 = sshll.u32 %s234, 4
          %s246 = int_to_ptr.vmem [resolvable:$true] %s245
          %248 = dma.hbm_to_vmem [thread:$0]  %s243, 128, %s246, %s231
        $region28: #{tpu_custom_call.1} parent=15 // pred_fallthru
          _
      $region16: #{tpu_custom_call.1} parent=5 // pred_fallthru
        _
      %p249 = scmp.le.s32.totalorder 1, %s20
      %p250 = scmp.lt.s32.totalorder %s20, 5
      %p251 = pnand %p249, %p250
      %p252 = pneg %p251
      // Predicated region
      $region29: #{tpu_custom_call.1} parent=5 // pred_check
        _
      $region30: #{tpu_custom_call.1} parent=5 // pred_check_branch
        %254 = sbr.rel (%p251) target = $region32
      $region31: #{tpu_custom_call.1} parent=5 // pred_region
        %s255 = ssub.s32 %s20, 1
        %s256 = sand.u32 %s53, 1
        %s257 = scalar_lea.sflag [#allocation7], %s256
        %s258 = sand.u32 %s53, 1
        %s259 = smul.addr %s258, 16
        %s260 = scalar_lea.vmem [#allocation6], %s259
        // Predicated region
        $region33: #{tpu_custom_call.1} parent=31 // pred_check
          %p261 = pneg %p66
        $region34: #{tpu_custom_call.1} parent=31 // pred_check_branch
          %263 = sbr.rel (%p261) target = $region36
        $region35: #{tpu_custom_call.1} parent=31 // pred_region
          %264 = dma.done %s257, 256
        $region36: #{tpu_custom_call.1} parent=31 // pred_fallthru
          _
        %s265 = sand.u32 %s25, 1
        %s266 = scalar_lea.sflag [#allocation10], %s265
        %s267 = sand.u32 %s87, 1
        %s268 = smul.addr %s267, 16
        %s269 = scalar_lea.vmem [#allocation9], %s268
        // Predicated region
        $region37: #{tpu_custom_call.1} parent=31 // pred_check
          %p270 = pneg %p100
        $region38: #{tpu_custom_call.1} parent=31 // pred_check_branch
          %272 = sbr.rel (%p270) target = $region40
        $region39: #{tpu_custom_call.1} parent=31 // pred_region
          %273 = dma.done %s266, 256
        $region40: #{tpu_custom_call.1} parent=31 // pred_fallthru
          _
        %s274 = sand.u32 %s25, 1
        %s275 = scalar_lea.sflag [#allocation10], %s274
        %s276 = sand.u32 %s121, 1
        %s277 = smul.addr %s276, 8
        %s278 = scalar_lea.vmem [#allocation11], %s277
        // Predicated region
        $region41: #{tpu_custom_call.1} parent=31 // pred_check
          %p279 = pneg %p134
        $region42: #{tpu_custom_call.1} parent=31 // pred_check_branch
          %281 = sbr.rel (%p279) target = $region44
        $region43: #{tpu_custom_call.1} parent=31 // pred_region
          %282 = dma.done %s275, 128
        $region44: #{tpu_custom_call.1} parent=31 // pred_fallthru
          _
        %s283 = sand.u32 %s53, 1
        %s284 = scalar_lea.sflag [#allocation7], %s283
        %s285 = sand.u32 %s53, 1
        %s286 = smul.addr %s285, 16
        %s287 = scalar_lea.vmem [#allocation6], %s286
        %p288 = pneg %p66
        %p289 = pneg %p63
        %s290 = sand.u32 %s25, 1
        %s291 = scalar_lea.sflag [#allocation10], %s290
        %s292 = sand.u32 %s87, 1
        %s293 = smul.addr %s292, 16
        %s294 = scalar_lea.vmem [#allocation9], %s293
        %p295 = pneg %p100
        %p296 = pneg %p97
        %s297 = sand.u32 %s25, 1
        %s298 = scalar_lea.sflag [#allocation10], %s297
        %s299 = sand.u32 %s121, 1
        %s300 = smul.addr %s299, 8
        %s301 = scalar_lea.vmem [#allocation11], %s300
        %p302 = pneg %p134
        %p303 = pneg %p131
        %p304 = pneg %p160
        %p305 = pneg %p157
        %s306 = sand.u32 %s147, 1
        %s307 = scalar_lea.sflag [#allocation8], %s306
        %s308 = sand.u32 %s147, 1
        %s309 = smul.addr %s308, 24
        %s310 = scalar_lea.vmem [#allocation12], %s309
        %s311 = smul.u32 %s29, 2
        %s312 = sadd.s32 %s311, %s30
        %p313 = scmp.lt.s32.totalorder %s312, 2
        %s314 = scalar_select %p313, %s312, 2
        %s315 = smul.u32 %s29, 2
        %s316 = sadd.s32 %s315, %s30
        %p317 = scmp.lt.s32.totalorder %s316, 2
        %s318 = scalar_select %p317, %s316, 2
        %s319 = smul.u32 %s29, 2
        %s320 = sadd.s32 %s319, %s30
        %p321 = scmp.lt.s32.totalorder %s320, 2
        %s322 = scalar_select %p321, %s320, 2
        %p323 = scmp.eq.s32.totalorder %s30, 0
        // Predicated region
        $region45: #{tpu_custom_call.1} parent=31 // pred_check
          %p324 = pneg %p323
        $region46: #{tpu_custom_call.1} parent=31 // pred_check_branch
          %326 = sbr.rel (%p324) target = $region48
        $region47: #{tpu_custom_call.1} parent=31 // pred_region
          %327 = vst [vmem:[#allocation2] sm:$0xff] 0.0
          %328 = vst [vmem:[#allocation2 + $0x8] sm:$0xff] 0.0
          %329 = vst [vmem:[#allocation3] sm:$0xf] 0.0
        $region48: #{tpu_custom_call.1} parent=31 // pred_fallthru
          _
        %s330 = sld [smem:[#allocation5]]
        %s331 = smul.u32 %s29, 2
        %s332 = sadd.s32 %s331, %s30
        %v333 = vlaneseq
        %v334 = vand.u32 %v333, 127
        %s335 = smul.u32 %s332, 128
        %v336 = vstv %s335
        %v337 = vadd.s32 %v334, %v336
        %v338 = vstv %s330
        %vm339 = vcmp.lt.s32.totalorder %v337, %v338
        %v340 = vld [vmem:[%s260] sm:$0xff]
        %v341 = vld [vmem:[%s260 + $0x8] sm:$0xff]
        %v342 = vld [vmem:[%s269] sm:$0xff]
        %v343 = vld [vmem:[%s269 + $0x8] sm:$0xff]
        %v344 = vsub.f32 %v340, %v342
        %v345 = vsub.f32 %v341, %v343
        %v346 = vld [vmem:[#allocation2] sm:$0xff]
        %v347 = vld [vmem:[#allocation2 + $0x8] sm:$0xff]
        %v348 = vand.u32 2147483647, %v344
        %v349 = vand.u32 2147483647, %v345
        %v350 = vsel %vm339, 1, 0
        %vm351 = vcmp.eq.s32.totalorder %v350, 1
        %v352 = vsel %vm351, %v348, 0.0
        %v353 = vsel %vm351, %v349, 0.0
        %v354 = vadd.f32 %v346, %v352
        %v355 = vadd.f32 %v347, %v353
        %356 = vst [vmem:[#allocation2] sm:$0xff] %v354
        %357 = vst [vmem:[#allocation2 + $0x8] sm:$0xff] %v355
        %v358 = vld [vmem:[%s278] sm:$0xff]
        %v360 = vrot.slane %v358, 4
        %v362 = vsub.f32 %v358, %v360
        %v363 = vld [vmem:[#allocation3] sm:$0xf]
        %v364 = vmul.f32 %v362, %v362
        %v365 = vsel %vm351, %v364, 0.0
        %v366 = vadd.f32 %v363, %v365
        %367 = vst [vmem:[#allocation3] sm:$0xf] %v366
        %p368 = scmp.eq.s32.totalorder %s30, 1
        // Predicated region
        $region49: #{tpu_custom_call.1} parent=31 // pred_check
          %p369 = pneg %p368
        $region50: #{tpu_custom_call.1} parent=31 // pred_check_branch
          %371 = sbr.rel (%p369) target = $region52
        $region51: #{tpu_custom_call.1} parent=31 // pred_region
          %v372 = vld [vmem:[#allocation3] sm:$0xf]
          %v373 = vld [vmem:[#allocation2] sm:$0xff]
          %v374 = vld [vmem:[#allocation2 + $0x8] sm:$0xff]
          %v375 = vadd.f32 %v373, %v374
          %376 = vadd.xlane.f32.xlu0 %v375
          %v377 = vpop.xlane.xlu0 %376
          %v378 = vrot.slane %v377, 4
          %v379 = vadd.f32 %v377, %v378
          %v380 = vrot.slane %v379, 2
          %v381 = vadd.f32 %v379, %v380
          %v382 = vrot.slane %v381, 1
          %v383 = vadd.f32 %v381, %v382
          %s384 = vtos %v383
          %vm385 = vcmask 1041408
          %v386 = vsel %vm385, %v372, 0.0
          %387 = vadd.xlane.f32.xlu0 %v386
          %v388 = vpop.xlane.xlu0 %387
          %v389 = vrot.slane %v388, 4
          %v390 = vadd.f32 %v388, %v389
          %v391 = vrot.slane %v390, 2
          %v392 = vadd.f32 %v390, %v391
          %v393 = vrot.slane %v392, 1
          %v394 = vadd.f32 %v392, %v393
          %s395 = vtos %v394
          %v397 = vrot.slane %v372, 2
          %v399 = vsel %vm385, %v397, 0.0
          %400 = vadd.xlane.f32.xlu0 %v399
          %v401 = vpop.xlane.xlu0 %400
          %v402 = vrot.slane %v401, 4
          %v403 = vadd.f32 %v401, %v402
          %v404 = vrot.slane %v403, 2
          %v405 = vadd.f32 %v403, %v404
          %v406 = vrot.slane %v405, 1
          %v407 = vadd.f32 %v405, %v406
          %s408 = vtos %v407
          %v409 = vstv %s384
          %410 = vst [vmem:[%s310] sm:$0xff] %v409
          %v411 = vstv %s395
          %s412 = scalar_lea.vmem %s310, 8 [#allocation12]
          %413 = vst [vmem:[%s412] sm:$0xff] %v411
          %v414 = vstv %s408
          %s415 = scalar_lea.vmem %s310, 16 [#allocation12]
          %416 = vst [vmem:[%s415] sm:$0xff] %v414
        $region52: #{tpu_custom_call.1} parent=31 // pred_fallthru
          _
        %s417 = sand.u32 %s147, 1
        %s418 = scalar_lea.sflag [#allocation8], %s417
        %s419 = sand.u32 %s147, 1
        %s420 = smul.addr %s419, 24
        %s421 = scalar_lea.vmem [#allocation12], %s420
        // Predicated region
        $region53: #{tpu_custom_call.1} parent=31 // pred_check
          %p422 = pneg %p157
        $region54: #{tpu_custom_call.1} parent=31 // pred_check_branch
          %424 = sbr.rel (%p422) target = $region56
        $region55: #{tpu_custom_call.1} parent=31 // pred_region
          %s426 = ssub.s32 384, 384
          %427 = vsyncadd %s418, %s426
          %s428 = smul.addr %s29, 3
          %s429 = smul.addr %s428, 128
          %s430 = scalar_lea.hbm %s4, %s429
          %s431 = sshll.u32 %s421, 4
          %s432 = int_to_ptr.vmem [resolvable:$true] %s431
          %437 = dma.vmem_to_hbm [thread:$0]  %s432, 384, %s430, %s418, 128, 128, 8
        $region56: #{tpu_custom_call.1} parent=31 // pred_fallthru
          _
      $region32: #{tpu_custom_call.1} parent=5 // pred_fallthru
        _
      %p438 = scmp.le.s32.totalorder 2, %s20
      // Predicated region
      $region57: #{tpu_custom_call.1} parent=5 // pred_check
        %p439 = pneg %p438
      $region58: #{tpu_custom_call.1} parent=5 // pred_check_branch
        %441 = sbr.rel (%p439) target = $region60
      $region59: #{tpu_custom_call.1} parent=5 // pred_region
        %s442 = ssub.s32 %s20, 2
        // Predicated region
        $region61: #{tpu_custom_call.1} parent=59 // pred_check
          %p443 = pneg %p163
        $region62: #{tpu_custom_call.1} parent=59 // pred_check_branch
          %445 = sbr.rel (%p443) target = $region64
        $region63: #{tpu_custom_call.1} parent=59 // pred_region
          %s446 = sand.u32 %s148, 1
          %s447 = scalar_lea.sflag [#allocation8], %s446
          %s448 = sand.u32 %s148, 1
          %s449 = smul.addr %s448, 24
          %s450 = scalar_lea.vmem [#allocation12], %s449
          %451 = dma.done %s447, 384
        $region64: #{tpu_custom_call.1} parent=59 // pred_fallthru
          _
      $region60: #{tpu_custom_call.1} parent=5 // pred_fallthru
        _
    $region6: #{tpu_custom_call.1} parent=1 // loop_footer
      %s24 = sadd.s32 1, %s20
    $region7: #{tpu_custom_call.1} parent=1 // loop_footer_branch
      %19 = sbr.rel target = $region3
    $region8: #{tpu_custom_call.1} parent=1 // loop_exit
      _
    %452 = vsyncpa [#allocation7], 1
    %s453 = scalar_lea.sflag [#allocation7], 1
    %454 = vsyncpa %s453, 1
    %455 = vsyncpa [#allocation10], 1
    %s456 = scalar_lea.sflag [#allocation10], 1
    %457 = vsyncpa %s456, 1
    %458 = vsyncpa [#allocation8], 1
    %s459 = scalar_lea.sflag [#allocation8], 1
    %460 = vsyncpa %s459, 1

</llo_original>
